<compile_context>
chip_gen: v7x
topology: tpu7x:2x2x1
jax: 0.10.0
libtpu: 0.0.40
codegen_flags: <defaults>
</compile_context>

<pallas_src>
import math

import jax
import jax.numpy as jnp
from jax.experimental import pallas as pl
from jax.experimental.pallas import tpu as pltpu


def _vmem_budget():
    """Per-generation (scoped VMEM limit, per-array block cap) in bytes."""
    vmem_cap = 64 * 1024 * 1024          # conservative default (v7x per-TC)
    try:
        info = pltpu.get_tpu_info()
        cap = getattr(info, "vmem_capacity_bytes", None)
        if cap:
            vmem_cap = int(cap)
    except Exception:
        pass
    # Scoped limit with headroom below physical VMEM.
    limit = max(32 << 20, min((vmem_cap * 3) // 4, 64 << 20))
    # Block cap: 2 input + 2 output double-buffered blocks must fit the limit.
    block_cap = min(8 << 20, limit // 8)
    if vmem_cap <= (64 << 20):           # v7x: 64 MiB per TensorCore
        block_cap = min(block_cap, 4 << 20)
    return limit, block_cap


def _merge_adjacent_axes(shape, dims):
    """Collapse input axes that remain adjacent (and in order) in the output.

    Returns (merged_input_shape, merged_dims): the same permutation expressed
    on the merged axes.
    """
    groups = [[dims[0]]]
    for d in dims[1:]:
        if d == groups[-1][-1] + 1:
            groups[-1].append(d)
        else:
            groups.append([d])
    # Order the groups by their position in the *input*.
    order = sorted(range(len(groups)), key=lambda g: groups[g][0])
    merged_in_shape = tuple(
        math.prod(shape[a] for a in groups[g]) for g in order)
    group_to_axis = {g: i for i, g in enumerate(order)}
    merged_dims = tuple(group_to_axis[g] for g in range(len(groups)))
    return merged_in_shape, merged_dims


def _largest_aligned_tile(size, cap, align):
    """Largest valid tile <= min(size, cap): the full axis or an align-multiple."""
    if size <= cap:
        return size
    if align <= 1:
        return max(1, cap)
    if cap >= align:
        return (cap // align) * align
    return min(align, size)      # hard floor: one aligned unit (or the full axis)


def _shrink_tile(t, size, align):
    """Strictly smaller valid tile along this axis, or t if impossible."""
    if t <= 1:
        return t
    target = max(1, -(-t // 2))
    new = _largest_aligned_tile(size, target, align)
    return new if new < t else t


def _transpose_pallas(xm, m_dims, block_cap, vmem_limit):
    """General tiled Pallas transpose of xm by m_dims (ndim >= 2)."""
    m = xm.ndim
    in_shape = xm.shape
    out_shape = tuple(in_shape[d] for d in m_dims)
    itemsize = xm.dtype.itemsize
    sub_align = 8 * max(1, 4 // itemsize)      # f32: 8, bf16: 16, int8: 32

    p0, p1 = m_dims[0], m_dims[1]              # input axes behind out axes 0, 1
    s0, s1 = in_shape[p0], in_shape[p1]
    rest = max(1, math.prod(in_shape) // max(1, s0 * s1))

    def axis_align(in_axis, out_axis):
        a = 1
        if in_axis == m - 1:
            a = 128
        elif in_axis == m - 2:
            a = max(a, sub_align)
        if out_axis == m - 1:
            a = max(a, 128)
        elif out_axis == m - 2:
            a = max(a, sub_align)
        return a

    a0 = axis_align(p0, 0)
    a1 = axis_align(p1, 1)

    # Largest tiles under the per-array block budget; prefer a full inner
    # output axis (t1 = s1) and fold the leading output axis (t0) on top.
    slab_bytes = s1 * rest * itemsize
    if slab_bytes <= block_cap:
        t1 = s1
        t0 = _largest_aligned_tile(s0, max(1, block_cap // slab_bytes), a0)
    else:
        t0 = min(s0, a0)
        unit = rest * itemsize * t0
        t1 = _largest_aligned_tile(s1, max(1, block_cap // unit), a1)

    # Guarantee enough grid steps for DMA/compute overlap and, on v7x, for
    # both TensorCores ("parallel" axes).
    total_bytes = math.prod(in_shape) * itemsize
    if total_bytes >= (1 << 20):
        min_steps = 4
    elif total_bytes >= (256 << 10):
        min_steps = 2
    else:
        min_steps = 1

    def nsteps(ta, tb):
        return pl.cdiv(s0, ta) * pl.cdiv(s1, tb)

    while nsteps(t0, t1) < min_steps:
        new0 = _shrink_tile(t0, s0, a0)        # shrink the batch-fold axis first
        if new0 < t0:
            t0 = new0
            continue
        new1 = _shrink_tile(t1, s1, a1)
        if new1 < t1:
            t1 = new1
            continue
        break

    grid = (pl.cdiv(s0, t0), pl.cdiv(s1, t1))

    in_block = list(in_shape)
    in_block[p0] = t0
    in_block[p1] = t1
    out_block = list(out_shape)
    out_block[0] = t0
    out_block[1] = t1

    def in_index_map(i, j, _p0=p0, _p1=p1, _m=m):
        idx = [0] * _m
        idx[_p0] = i
        idx[_p1] = j
        return tuple(idx)

    def out_index_map(i, j, _m=m):
        return (i, j) + (0,) * (_m - 2)

    def kernel(x_ref, o_ref):
        o_ref[...] = jnp.transpose(x_ref[...], m_dims)

    block_bytes = t0 * t1 * rest * itemsize
    vmem_limit = max(vmem_limit, 4 * block_bytes + (2 << 20))

    return pl.pallas_call(
        kernel,
        out_shape=jax.ShapeDtypeStruct(out_shape, xm.dtype),
        grid=grid,
        in_specs=[pl.BlockSpec(tuple(in_block), in_index_map)],
        out_specs=pl.BlockSpec(tuple(out_block), out_index_map),
        compiler_params=pltpu.CompilerParams(
            dimension_semantics=("parallel", "parallel"),
            vmem_limit_bytes=vmem_limit),
        cost_estimate=pl.CostEstimate(
            flops=0, transcendentals=0,
            bytes_accessed=2 * total_bytes),
    )(xm)


def permute_pallas(x, dims, *, max_block_bytes=None):
    """Pallas implementation of torch's x.permute(*dims)."""
    n = x.ndim
    dims = tuple(int(d) % n for d in dims) if n else tuple(dims)
    assert sorted(dims) == list(range(n)), "dims must be a permutation of axes"
    out_shape = tuple(x.shape[d] for d in dims)

    if n <= 1 or dims == tuple(range(n)):
        return x                               # identity permutation

    # Drop size-1 axes: moving them is a free reshape, not data movement.
    kept = [a for a in range(n) if x.shape[a] != 1]
    if not kept:
        return x.reshape(out_shape)
    pos = {a: i for i, a in enumerate(kept)}
    s_dims = tuple(pos[d] for d in dims if x.shape[d] != 1)
    xs = x.reshape(tuple(x.shape[a] for a in kept))
    if s_dims == tuple(range(len(s_dims))):
        return x.reshape(out_shape)            # pure relabeling of size-1 axes

    # Merge input axes that stay adjacent (and ordered) in the output:
    # NCHW->NHWC becomes a per-batch (C, H*W) -> (H*W, C) transpose with a
    # lane-dense input tile.
    m_in_shape, m_dims = _merge_adjacent_axes(xs.shape, s_dims)
    xm = xs.reshape(m_in_shape)                # free: contiguous view

    vmem_limit, block_cap = _vmem_budget()
    if max_block_bytes is not None:
        block_cap = int(max_block_bytes)

    out_m = _transpose_pallas(xm, m_dims, block_cap, vmem_limit)
    return out_m.reshape(out_shape)            # free: contiguous result


if __name__ == "__main__":
    key = jax.random.PRNGKey(0)
    k0, k1 = jax.random.split(key)

    # Small NCHW input, consistent with a conv-style tensor.
    x = jax.random.normal(k0, (2, 4, 16, 16), dtype=jnp.float32)

    # Main case from the module: NCHW -> NHWC (merged to a (C, H*W) transpose).
    dims = (0, 2, 3, 1)
    out = jax.block_until_ready(permute_pallas(x, dims))
    ref = jnp.transpose(x, dims)
    assert out.shape == ref.shape and out.dtype == ref.dtype
    assert bool(jnp.array_equal(out, ref)), "NCHW->NHWC mismatch"

    # Reverse permutation: NHWC -> NCHW (lane-dense 256-wide output this time).
    x2 = ref                                   # (2, 16, 16, 4)
    dims2 = (0, 3, 1, 2)
    out2 = jax.block_until_ready(permute_pallas(x2, dims2))
    ref2 = jnp.transpose(x2, dims2)
    assert bool(jnp.array_equal(out2, ref2)), "NHWC->NCHW mismatch"

    # Tiny forced budget exercises the inner-axis tiling + cdiv grid path
    # (t0=1, 128-aligned tile over the merged H*W axis -> grid (2, 2)).
    out3 = jax.block_until_ready(permute_pallas(x, dims, max_block_bytes=2048))
    assert bool(jnp.array_equal(out3, ref)), "tiled-path mismatch"

    # Leading-axis-moving permute (2-D transpose): now goes through the same
    # tiled, pipelined path (no 8 MiB single-block cap); >=2 grid steps.
    x3 = jax.random.normal(k1, (256, 512), dtype=jnp.float32)
    out4 = jax.block_until_ready(permute_pallas(x3, (1, 0)))
    assert bool(jnp.array_equal(out4, jnp.transpose(x3))), "2-D transpose mismatch"

    print("KERNEL_OK")
</pallas_src>

<mosaic_0001>
module attributes {stable_mosaic.version = 11 : i64} {
  func.func @kernel(%arg0: i32, %arg1: i32, %arg2: memref<2x4x256xf32, #tpu.memory_space<vmem>>, %arg3: memref<2x256x4xf32, #tpu.memory_space<vmem>>) attributes {dimension_semantics = [#tpu.dimension_semantics<parallel>, #tpu.dimension_semantics<parallel>], iteration_bounds = array<i64: 1, 1>, scalar_prefetch = 0 : i64, scratch_operands = 0 : i64, tpu.core_type = #tpu.core_type<tc>, window_params = [{transform_indices = @transform_0, window_bounds = array<i64: 2, 4, 256>}, {transform_indices = @transform_1, window_bounds = array<i64: 2, 256, 4>}]} {
    %c0 = arith.constant 0 : index
    %c0_0 = arith.constant 0 : index
    %c0_1 = arith.constant 0 : index
    %0 = vector.load %arg2[%c0, %c0_0, %c0_1] : memref<2x4x256xf32, #tpu.memory_space<vmem>>, vector<2x4x256xf32>
    %1 = tpu.transpose %0, [0, 2, 1] : vector<2x4x256xf32> -> vector<2x256x4xf32>
    %c0_2 = arith.constant 0 : index
    %c0_3 = arith.constant 0 : index
    %c0_4 = arith.constant 0 : index
    %2 = vector.load %arg3[%c0_2, %c0_3, %c0_4] : memref<2x256x4xf32, #tpu.memory_space<vmem>>, vector<2x256x4xf32>
    tpu.vector_store %arg3[%c0_2, %c0_3, %c0_4], %1 {strides = array<i32>} : memref<2x256x4xf32, #tpu.memory_space<vmem>>, vector<2x256x4xf32>,
    return
  }
  func.func @transform_0(%arg0: i32, %arg1: i32) -> (i32, i32, i32) {
    %c0_i32 = arith.constant 0 : i32
    %c0_i32_0 = arith.constant 0 : i32
    return %arg0, %c0_i32, %arg1 : i32, i32, i32
  }
  func.func @transform_1(%arg0: i32, %arg1: i32) -> (i32, i32, i32) {
    %c0_i32 = arith.constant 0 : i32
    %c0_i32_0 = arith.constant 0 : i32
    return %arg0, %arg1, %c0_i32 : i32, i32, i32
  }
}

</mosaic_0001>

<llo_original>
// kernel: tpu_custom_call.1
$region0: #{tpu_custom_call.1}
  #allocation0 [shape = 'u32[]', space=smem, size = 0x4, offset = 0x4, fixed_abs, tag = 'smem constant byte address 0x4 - core index']
  #allocation1 [shape = 'u32[144,128]{1,0:T(1,128)}', space=vmem, size = 0x12000, scoped, tag = 'internal scratch']
  %s0 = inlined_call_operand.hbm [shape: f32[2,4,256], index: 0, kind: input, shape index: {}]
  %s1 = inlined_call_operand.vmem [shape: f32[2,256,4], index: 1, kind: output, shape index: {}]
  %s2 = sld [smem:[#allocation0]]
  $region18: #{tpu_custom_call.1} parent=0
    _
  %s4 = ssub.s32 1, %s2
  %s5 = scalar_select 0, %s4, %s2
  $region1: #{tpu_custom_call.1} parent=0
    #allocation2 [shape = 'u8[8192]{0}', space=vmem, size = 0x2000, scoped, tag = 'input window, operand 0, single buffered']
    #allocation3 [shape = 's32[1]{0}', space=sflag, size = 0x4, scoped, tag = 'scoped memory for tpu_custom_call.1']
    %6 = vsyncpa [#allocation3], 0
    // Predicated region
    $region2: #{tpu_custom_call.1} parent=1 // pred_check
      _
    $region3: #{tpu_custom_call.1} parent=1 // pred_check_branch
      %8 = sbr.rel (0) target = $region5
    $region4: #{tpu_custom_call.1} parent=1 // pred_region
      %s10 = ssub.s32 256, 256
      %11 = vsyncadd [#allocation3], %s10
      %s12 = sshll.u32 [#allocation2], 4
      %s13 = int_to_ptr.vmem [resolvable:$true] %s12
      %18 = dma.hbm_to_vmem [thread:$0]  %s0, 256, %s13, [#allocation3], 128, 128, 8
    $region5: #{tpu_custom_call.1} parent=1 // pred_fallthru
      _
    // Predicated region
    $region6: #{tpu_custom_call.1} parent=1 // pred_check
      _
    $region7: #{tpu_custom_call.1} parent=1 // pred_check_branch
      %20 = sbr.rel (0) target = $region9
    $region8: #{tpu_custom_call.1} parent=1 // pred_region
      %21 = dma.done [#allocation3], 256
    $region9: #{tpu_custom_call.1} parent=1 // pred_fallthru
      _
    %v22 = vld [vmem:[#allocation2] sm:$0xff]
    %v23 = vld [vmem:[#allocation2 + $0x8] sm:$0xff]
    %v26 = vcombine.high %v22, %v22
    %v27 = vcombine.high %v23, %v23
    %30 = vxpose.xlu0.b32.start [1/16] %v22, 128
    %31 = vxpose.xlu0.b32.cont [2/16] 0.0, 128
    %32 = vxpose.xlu0.b32.cont [3/16] 0.0, 128
    %33 = vxpose.xlu0.b32.cont [4/16] 0.0, 128
    %34 = vxpose.xlu0.b32.cont [5/16] 0.0, 128
    %35 = vxpose.xlu0.b32.cont [6/16] 0.0, 128
    %36 = vxpose.xlu0.b32.cont [7/16] 0.0, 128
    %37 = vxpose.xlu0.b32.cont [8/16] 0.0, 128
    %38 = vxpose.xlu0.b32.cont [9/16] 0.0, 128
    %39 = vxpose.xlu0.b32.cont [10/16] 0.0, 128
    %40 = vxpose.xlu0.b32.cont [11/16] 0.0, 128
    %41 = vxpose.xlu0.b32.cont [12/16] 0.0, 128
    %42 = vxpose.xlu0.b32.cont [13/16] 0.0, 128
    %43 = vxpose.xlu0.b32.cont [14/16] 0.0, 128
    %44 = vxpose.xlu0.b32.cont [15/16] 0.0, 128
    %45 = vxpose.xlu0.b32.end [16/16] 0.0, 128
    %v46 = vpop.trf.xlu0
    %v47 = vpop.trf.xlu0
    %v48 = vpop.trf.xlu0
    %v49 = vpop.trf.xlu0
    %v50 = vpop.trf.xlu0
    %v51 = vpop.trf.xlu0
    %v52 = vpop.trf.xlu0
    %v53 = vpop.trf.xlu0
    %v54 = vpop.trf.xlu0
    %v55 = vpop.trf.xlu0
    %v56 = vpop.trf.xlu0
    %v57 = vpop.trf.xlu0
    %v58 = vpop.trf.xlu0
    %v59 = vpop.trf.xlu0
    %v60 = vpop.trf.xlu0
    %v61 = vpop.trf.xlu0
    %62 = vxpose.xlu0.b32.start [1/16] %v26, 128
    %63 = vxpose.xlu0.b32.cont [2/16] 0.0, 128
    %64 = vxpose.xlu0.b32.cont [3/16] 0.0, 128
    %65 = vxpose.xlu0.b32.cont [4/16] 0.0, 128
    %66 = vxpose.xlu0.b32.cont [5/16] 0.0, 128
    %67 = vxpose.xlu0.b32.cont [6/16] 0.0, 128
    %68 = vxpose.xlu0.b32.cont [7/16] 0.0, 128
    %69 = vxpose.xlu0.b32.cont [8/16] 0.0, 128
    %70 = vxpose.xlu0.b32.cont [9/16] 0.0, 128
    %71 = vxpose.xlu0.b32.cont [10/16] 0.0, 128
    %72 = vxpose.xlu0.b32.cont [11/16] 0.0, 128
    %73 = vxpose.xlu0.b32.cont [12/16] 0.0, 128
    %74 = vxpose.xlu0.b32.cont [13/16] 0.0, 128
    %75 = vxpose.xlu0.b32.cont [14/16] 0.0, 128
    %76 = vxpose.xlu0.b32.cont [15/16] 0.0, 128
    %77 = vxpose.xlu0.b32.end [16/16] 0.0, 128
    %v78 = vpop.trf.xlu0
    %v79 = vpop.trf.xlu0
    %v80 = vpop.trf.xlu0
    %v81 = vpop.trf.xlu0
    %v82 = vpop.trf.xlu0
    %v83 = vpop.trf.xlu0
    %v84 = vpop.trf.xlu0
    %v85 = vpop.trf.xlu0
    %v86 = vpop.trf.xlu0
    %v87 = vpop.trf.xlu0
    %v88 = vpop.trf.xlu0
    %v89 = vpop.trf.xlu0
    %v90 = vpop.trf.xlu0
    %v91 = vpop.trf.xlu0
    %v92 = vpop.trf.xlu0
    %v93 = vpop.trf.xlu0
    %94 = vxpose.xlu0.b32.start [1/16] %v23, 128
    %95 = vxpose.xlu0.b32.cont [2/16] 0.0, 128
    %96 = vxpose.xlu0.b32.cont [3/16] 0.0, 128
    %97 = vxpose.xlu0.b32.cont [4/16] 0.0, 128
    %98 = vxpose.xlu0.b32.cont [5/16] 0.0, 128
    %99 = vxpose.xlu0.b32.cont [6/16] 0.0, 128
    %100 = vxpose.xlu0.b32.cont [7/16] 0.0, 128
    %101 = vxpose.xlu0.b32.cont [8/16] 0.0, 128
    %102 = vxpose.xlu0.b32.cont [9/16] 0.0, 128
    %103 = vxpose.xlu0.b32.cont [10/16] 0.0, 128
    %104 = vxpose.xlu0.b32.cont [11/16] 0.0, 128
    %105 = vxpose.xlu0.b32.cont [12/16] 0.0, 128
    %106 = vxpose.xlu0.b32.cont [13/16] 0.0, 128
    %107 = vxpose.xlu0.b32.cont [14/16] 0.0, 128
    %108 = vxpose.xlu0.b32.cont [15/16] 0.0, 128
    %109 = vxpose.xlu0.b32.end [16/16] 0.0, 128
    %v110 = vpop.trf.xlu0
    %v111 = vpop.trf.xlu0
    %v112 = vpop.trf.xlu0
    %v113 = vpop.trf.xlu0
    %v114 = vpop.trf.xlu0
    %v115 = vpop.trf.xlu0
    %v116 = vpop.trf.xlu0
    %v117 = vpop.trf.xlu0
    %v118 = vpop.trf.xlu0
    %v119 = vpop.trf.xlu0
    %v120 = vpop.trf.xlu0
    %v121 = vpop.trf.xlu0
    %v122 = vpop.trf.xlu0
    %v123 = vpop.trf.xlu0
    %v124 = vpop.trf.xlu0
    %v125 = vpop.trf.xlu0
    %126 = vxpose.xlu0.b32.start [1/16] %v27, 128
    %127 = vxpose.xlu0.b32.cont [2/16] 0.0, 128
    %128 = vxpose.xlu0.b32.cont [3/16] 0.0, 128
    %129 = vxpose.xlu0.b32.cont [4/16] 0.0, 128
    %130 = vxpose.xlu0.b32.cont [5/16] 0.0, 128
    %131 = vxpose.xlu0.b32.cont [6/16] 0.0, 128
    %132 = vxpose.xlu0.b32.cont [7/16] 0.0, 128
    %133 = vxpose.xlu0.b32.cont [8/16] 0.0, 128
    %134 = vxpose.xlu0.b32.cont [9/16] 0.0, 128
    %135 = vxpose.xlu0.b32.cont [10/16] 0.0, 128
    %136 = vxpose.xlu0.b32.cont [11/16] 0.0, 128
    %137 = vxpose.xlu0.b32.cont [12/16] 0.0, 128
    %138 = vxpose.xlu0.b32.cont [13/16] 0.0, 128
    %139 = vxpose.xlu0.b32.cont [14/16] 0.0, 128
    %140 = vxpose.xlu0.b32.cont [15/16] 0.0, 128
    %141 = vxpose.xlu0.b32.end [16/16] 0.0, 128
    %v142 = vpop.trf.xlu0
    %v143 = vpop.trf.xlu0
    %v144 = vpop.trf.xlu0
    %v145 = vpop.trf.xlu0
    %v146 = vpop.trf.xlu0
    %v147 = vpop.trf.xlu0
    %v148 = vpop.trf.xlu0
    %v149 = vpop.trf.xlu0
    %v150 = vpop.trf.xlu0
    %v151 = vpop.trf.xlu0
    %v152 = vpop.trf.xlu0
    %v153 = vpop.trf.xlu0
    %v154 = vpop.trf.xlu0
    %v155 = vpop.trf.xlu0
    %v156 = vpop.trf.xlu0
    %v157 = vpop.trf.xlu0
    %vm158 = vcmask 31744
    %159 = vst.msk [vmem:[%s1] sm:$0xff] %vm158, %v46
    %160 = vst.msk [vmem:[%s1 + $0x8] sm:$0xff] %vm158, %v47
    %161 = vst.msk [vmem:[%s1 + $0x10] sm:$0xff] %vm158, %v48
    %162 = vst.msk [vmem:[%s1 + $0x18] sm:$0xff] %vm158, %v49
    %163 = vst.msk [vmem:[%s1 + $0x20] sm:$0xff] %vm158, %v50
    %164 = vst.msk [vmem:[%s1 + $0x28] sm:$0xff] %vm158, %v51
    %165 = vst.msk [vmem:[%s1 + $0x30] sm:$0xff] %vm158, %v52
    %166 = vst.msk [vmem:[%s1 + $0x38] sm:$0xff] %vm158, %v53
    %167 = vst.msk [vmem:[%s1 + $0x40] sm:$0xff] %vm158, %v54
    %168 = vst.msk [vmem:[%s1 + $0x48] sm:$0xff] %vm158, %v55
    %169 = vst.msk [vmem:[%s1 + $0x50] sm:$0xff] %vm158, %v56
    %170 = vst.msk [vmem:[%s1 + $0x58] sm:$0xff] %vm158, %v57
    %171 = vst.msk [vmem:[%s1 + $0x60] sm:$0xff] %vm158, %v58
    %172 = vst.msk [vmem:[%s1 + $0x68] sm:$0xff] %vm158, %v59
    %173 = vst.msk [vmem:[%s1 + $0x70] sm:$0xff] %vm158, %v60
    %174 = vst.msk [vmem:[%s1 + $0x78] sm:$0xff] %vm158, %v61
    %175 = vst.msk [vmem:[%s1 + $0x80] sm:$0xff] %vm158, %v78
    %176 = vst.msk [vmem:[%s1 + $0x88] sm:$0xff] %vm158, %v79
    %177 = vst.msk [vmem:[%s1 + $0x90] sm:$0xff] %vm158, %v80
    %178 = vst.msk [vmem:[%s1 + $0x98] sm:$0xff] %vm158, %v81
    %179 = vst.msk [vmem:[%s1 + $0xa0] sm:$0xff] %vm158, %v82
    %180 = vst.msk [vmem:[%s1 + $0xa8] sm:$0xff] %vm158, %v83
    %181 = vst.msk [vmem:[%s1 + $0xb0] sm:$0xff] %vm158, %v84
    %182 = vst.msk [vmem:[%s1 + $0xb8] sm:$0xff] %vm158, %v85
    %183 = vst.msk [vmem:[%s1 + $0xc0] sm:$0xff] %vm158, %v86
    %184 = vst.msk [vmem:[%s1 + $0xc8] sm:$0xff] %vm158, %v87
    %185 = vst.msk [vmem:[%s1 + $0xd0] sm:$0xff] %vm158, %v88
    %186 = vst.msk [vmem:[%s1 + $0xd8] sm:$0xff] %vm158, %v89
    %187 = vst.msk [vmem:[%s1 + $0xe0] sm:$0xff] %vm158, %v90
    %188 = vst.msk [vmem:[%s1 + $0xe8] sm:$0xff] %vm158, %v91
    %189 = vst.msk [vmem:[%s1 + $0xf0] sm:$0xff] %vm158, %v92
    %190 = vst.msk [vmem:[%s1 + $0xf8] sm:$0xff] %vm158, %v93
    %191 = vst.msk [vmem:[%s1 + $0x100] sm:$0xff] %vm158, %v110
    %192 = vst.msk [vmem:[%s1 + $0x108] sm:$0xff] %vm158, %v111
    %193 = vst.msk [vmem:[%s1 + $0x110] sm:$0xff] %vm158, %v112
    %194 = vst.msk [vmem:[%s1 + $0x118] sm:$0xff] %vm158, %v113
    %195 = vst.msk [vmem:[%s1 + $0x120] sm:$0xff] %vm158, %v114
    %196 = vst.msk [vmem:[%s1 + $0x128] sm:$0xff] %vm158, %v115
    %197 = vst.msk [vmem:[%s1 + $0x130] sm:$0xff] %vm158, %v116
    %198 = vst.msk [vmem:[%s1 + $0x138] sm:$0xff] %vm158, %v117
    %199 = vst.msk [vmem:[%s1 + $0x140] sm:$0xff] %vm158, %v118
    %200 = vst.msk [vmem:[%s1 + $0x148] sm:$0xff] %vm158, %v119
    %201 = vst.msk [vmem:[%s1 + $0x150] sm:$0xff] %vm158, %v120
    %202 = vst.msk [vmem:[%s1 + $0x158] sm:$0xff] %vm158, %v121
    %203 = vst.msk [vmem:[%s1 + $0x160] sm:$0xff] %vm158, %v122
    %204 = vst.msk [vmem:[%s1 + $0x168] sm:$0xff] %vm158, %v123
    %205 = vst.msk [vmem:[%s1 + $0x170] sm:$0xff] %vm158, %v124
    %206 = vst.msk [vmem:[%s1 + $0x178] sm:$0xff] %vm158, %v125
    %207 = vst.msk [vmem:[%s1 + $0x180] sm:$0xff] %vm158, %v142
    %208 = vst.msk [vmem:[%s1 + $0x188] sm:$0xff] %vm158, %v143
    %209 = vst.msk [vmem:[%s1 + $0x190] sm:$0xff] %vm158, %v144
    %210 = vst.msk [vmem:[%s1 + $0x198] sm:$0xff] %vm158, %v145
    %211 = vst.msk [vmem:[%s1 + $0x1a0] sm:$0xff] %vm158, %v146
    %212 = vst.msk [vmem:[%s1 + $0x1a8] sm:$0xff] %vm158, %v147
    %213 = vst.msk [vmem:[%s1 + $0x1b0] sm:$0xff] %vm158, %v148
    %214 = vst.msk [vmem:[%s1 + $0x1b8] sm:$0xff] %vm158, %v149
    %215 = vst.msk [vmem:[%s1 + $0x1c0] sm:$0xff] %vm158, %v150
    %216 = vst.msk [vmem:[%s1 + $0x1c8] sm:$0xff] %vm158, %v151
    %217 = vst.msk [vmem:[%s1 + $0x1d0] sm:$0xff] %vm158, %v152
    %218 = vst.msk [vmem:[%s1 + $0x1d8] sm:$0xff] %vm158, %v153
    %219 = vst.msk [vmem:[%s1 + $0x1e0] sm:$0xff] %vm158, %v154
    %220 = vst.msk [vmem:[%s1 + $0x1e8] sm:$0xff] %vm158, %v155
    %221 = vst.msk [vmem:[%s1 + $0x1f0] sm:$0xff] %vm158, %v156
    %222 = vst.msk [vmem:[%s1 + $0x1f8] sm:$0xff] %vm158, %v157
    // Predicated region
    $region10: #{tpu_custom_call.1} parent=1 // pred_check
      _
    $region11: #{tpu_custom_call.1} parent=1 // pred_check_branch
      %224 = sbr.rel (0) target = $region13
    $region12: #{tpu_custom_call.1} parent=1 // pred_region
      _
    $region13: #{tpu_custom_call.1} parent=1 // pred_fallthru
      _
    // Predicated region
    $region14: #{tpu_custom_call.1} parent=1 // pred_check
      _
    $region15: #{tpu_custom_call.1} parent=1 // pred_check_branch
      %226 = sbr.rel (0) target = $region17
    $region16: #{tpu_custom_call.1} parent=1 // pred_region
      _
    $region17: #{tpu_custom_call.1} parent=1 // pred_fallthru
      _
    %227 = vsyncpa [#allocation3], 1

</llo_original>
